<compile_context>
chip_gen: v7x
topology: tpu7x:2x2x1
jax: 0.10.0
libtpu: 0.0.40
codegen_flags: <defaults>
</compile_context>

<pallas_src>
import math

import jax
import jax.numpy as jnp
from jax.experimental import pallas as pl
from jax.experimental.pallas import tpu as pltpu

# ----------------------------- problem sizes --------------------------------
B = 2          # batch
S = 8          # sequence length
D = 32         # input_dim (embedding_dim == input_dim)
NB_HEADS = 4   # nb_heads
HID = 64       # hidden_size of the MLP
DH = D // NB_HEADS
HS = NB_HEADS * S
LN_EPS = 1e-5  # torch.nn.LayerNorm default


def _gelu_exact(x):
    # nn.GELU() default: 0.5 * x * (1 + erf(x / sqrt(2)))
    return 0.5 * x * (1.0 + jax.lax.erf(x * (1.0 / math.sqrt(2.0))))


def _layernorm(x, gamma, beta):
    mu = jnp.mean(x, axis=-1, keepdims=True)
    var = jnp.mean((x - mu) ** 2, axis=-1, keepdims=True)
    return (x - mu) * jax.lax.rsqrt(var + LN_EPS) * gamma + beta


# ------------------------------ Pallas kernel --------------------------------
def encoder_block_kernel(
    x_ref,                              # (B*S, D)
    wqkv_ref, bqkv_ref,                 # (D, 3D), (1, 3D)
    wo_ref, bo_ref,                     # (D, D), (1, D)
    ln1_g_ref, ln1_b_ref,               # (1, D)
    w1_ref, b1_ref,                     # (D, HID), (1, HID)
    w2_ref, b2_ref,                     # (HID, D), (1, D)
    ln2_g_ref, ln2_b_ref,               # (1, D)
    head_mask_ref,                      # (HS, D)  : 1 where row-head == feature-head
    blk_sum_ref,                        # (HS, HS) : 1 where same head block
    out_ref,                            # (B*S, D)
):
    x = x_ref[...]                                                    # (B*S, D)

    # ---------------- fused QKV projection (whole batch, one matmul) ---------
    qkv = jnp.dot(x, wqkv_ref[...],
                  preferred_element_type=jnp.float32) + bqkv_ref[...]  # (B*S, 3D)
    scale = 1.0 / math.sqrt(DH)
    q_all = qkv[:, 0 * D:1 * D] * scale        # scale folded into Q once
    k_all = qkv[:, 1 * D:2 * D]
    v_all = qkv[:, 2 * D:3 * D]

    head_mask = head_mask_ref[...]             # (HS, D)
    blk_sum = blk_sum_ref[...]                 # (HS, HS)

    # ---------------- attention: all heads per batch via masked matmuls ------
    ctx_rows = []
    for b in range(B):                         # static, tiny (B == 2)
        r0 = b * S
        q_b = q_all[r0:r0 + S, :]                                          # (S, D)
        # replicate this batch's K/V rows NB_HEADS times along sublanes and
        # zero out features not belonging to the row's head
        k_rows = jnp.concatenate([k_all[r0:r0 + S, :]] * NB_HEADS, axis=0) * head_mask  # (HS, D)
        v_rows = jnp.concatenate([v_all[r0:r0 + S, :]] * NB_HEADS, axis=0) * head_mask  # (HS, D)

        # scores[s, h*S + t] = sum_{d in head h} q_b[s, d] * k_b[t, d]
        scores = jax.lax.dot_general(
            q_b, k_rows, (((1,), (1,)), ((), ())),
            preferred_element_type=jnp.float32)                            # (S, HS)

        m = jnp.max(scores, axis=-1, keepdims=True)      # row shift (softmax-invariant per block)
        p = jnp.exp(scores - m)
        # per-head-block row sums, broadcast across each block via one matmul
        denom = jnp.dot(p, blk_sum, preferred_element_type=jnp.float32)    # (S, HS)
        p = p / denom

        # ctx[s, d] = sum_t softmax_h(d)[s, t] * v_b[t, d]  (heads already concatenated)
        ctx_rows.append(jnp.dot(p, v_rows, preferred_element_type=jnp.float32))  # (S, D)

    attn = jnp.concatenate(ctx_rows, axis=0)                               # (B*S, D)

    # output projection
    attn = jnp.dot(attn, wo_ref[...],
                   preferred_element_type=jnp.float32) + bo_ref[...]

    # residual + layer norm 1
    x1 = _layernorm(attn + x, ln1_g_ref[...], ln1_b_ref[...])

    # ---------------- feed-forward MLP (whole batch) -------------------------
    h1 = jnp.dot(x1, w1_ref[...], preferred_element_type=jnp.float32) + b1_ref[...]
    h1 = _gelu_exact(h1)
    h2 = jnp.dot(h1, w2_ref[...], preferred_element_type=jnp.float32) + b2_ref[...]

    # residual + layer norm 2
    out_ref[...] = _layernorm(h2 + x1, ln2_g_ref[...], ln2_b_ref[...]).astype(out_ref.dtype)


# ------------------------------ param packing --------------------------------
def pack_params(params):
    """One-time parameter transform (outside the per-call hot path)."""
    (wq, bq, wk, bk, wv, bv, wo, bo,
     ln1_g, ln1_b, w1, b1, w2, b2, ln2_g, ln2_b) = params

    w_qkv = jnp.concatenate([wq, wk, wv], axis=1)        # (D, 3D)
    b_qkv = jnp.concatenate([bq, bk, bv], axis=1)        # (1, 3D)

    rows = jnp.arange(HS)[:, None]
    cols_d = jnp.arange(D)[None, :]
    cols_j = jnp.arange(HS)[None, :]
    head_mask = ((rows // S) == (cols_d // DH)).astype(jnp.float32)   # (HS, D)
    blk_sum = ((rows // S) == (cols_j // S)).astype(jnp.float32)      # (HS, HS)

    return (w_qkv, b_qkv, wo, bo, ln1_g, ln1_b,
            w1, b1, w2, b2, ln2_g, ln2_b, head_mask, blk_sum)


# ------------------------------ wrapper ---------------------------------
def encoder_block(x, packed):
    Bx, Sx, Dx = x.shape
    x2d = x.reshape(Bx * Sx, Dx)                         # free XLA reshape

    n_in = 1 + len(packed)
    vmem_spec = lambda: pl.BlockSpec(memory_space=pltpu.MemorySpace.VMEM)

    out2d = pl.pallas_call(
        encoder_block_kernel,
        out_shape=jax.ShapeDtypeStruct((Bx * Sx, Dx), jnp.float32),
        in_specs=[vmem_spec() for _ in range(n_in)],
        out_specs=vmem_spec(),
    )(x2d, *packed)

    return out2d.reshape(Bx, Sx, Dx)


# -------------------------- pure-JAX reference ----------------------------
def encoder_block_ref(x, params):
    (wq, bq, wk, bk, wv, bv, wo, bo,
     ln1_g, ln1_b, w1, b1, w2, b2, ln2_g, ln2_b) = params

    def one(xb):
        q = xb @ wq + bq[0]
        k = xb @ wk + bk[0]
        v = xb @ wv + bv[0]
        outs = []
        for h in range(NB_HEADS):
            sl = slice(h * DH, (h + 1) * DH)
            sc = (q[:, sl] @ k[:, sl].T) / math.sqrt(DH)
            p = jax.nn.softmax(sc, axis=-1)
            outs.append(p @ v[:, sl])
        attn = jnp.concatenate(outs, axis=-1) @ wo + bo[0]
        x1 = _layernorm(attn + xb, ln1_g[0], ln1_b[0])
        h1 = _gelu_exact(x1 @ w1 + b1[0])
        h2 = h1 @ w2 + b2[0]
        return _layernorm(h2 + x1, ln2_g[0], ln2_b[0])

    return jax.vmap(one)(x)


# ------------------------------- main ------------------------------------
if __name__ == "__main__":
    key = jax.random.PRNGKey(0)
    keys = jax.random.split(key, 20)

    def rnd(k, shape, s=0.02):
        return jax.random.normal(k, shape, dtype=jnp.float32) * s

    wq = rnd(keys[0], (D, D));   bq = rnd(keys[1], (1, D))
    wk = rnd(keys[2], (D, D));   bk = rnd(keys[3], (1, D))
    wv = rnd(keys[4], (D, D));   bv = rnd(keys[5], (1, D))
    wo = rnd(keys[6], (D, D));   bo = rnd(keys[7], (1, D))
    ln1_g = 1.0 + rnd(keys[8], (1, D), 0.1); ln1_b = rnd(keys[9], (1, D))
    w1 = rnd(keys[10], (D, HID)); b1 = rnd(keys[11], (1, HID))
    w2 = rnd(keys[12], (HID, D)); b2 = rnd(keys[13], (1, D))
    ln2_g = 1.0 + rnd(keys[14], (1, D), 0.1); ln2_b = rnd(keys[15], (1, D))

    params = (wq, bq, wk, bk, wv, bv, wo, bo,
              ln1_g, ln1_b, w1, b1, w2, b2, ln2_g, ln2_b)
    packed = pack_params(params)

    x = jax.random.normal(keys[16], (B, S, D), dtype=jnp.float32)

    out = encoder_block(x, packed)
    out = jax.block_until_ready(out)

    ref = encoder_block_ref(x, params)
    assert out.shape == (B, S, D)
    assert jnp.allclose(out, ref, atol=1e-4, rtol=1e-4), "mismatch vs reference"

    print("KERNEL_OK")
</pallas_src>

<mosaic_0001>
module attributes {stable_mosaic.version = 11 : i64} {
  func.func @encoder_block_kernel(%arg0: memref<16x32xf32, #tpu.memory_space<vmem>>, %arg1: memref<32x96xf32, #tpu.memory_space<vmem>>, %arg2: memref<1x96xf32, #tpu.memory_space<vmem>>, %arg3: memref<32x32xf32, #tpu.memory_space<vmem>>, %arg4: memref<1x32xf32, #tpu.memory_space<vmem>>, %arg5: memref<1x32xf32, #tpu.memory_space<vmem>>, %arg6: memref<1x32xf32, #tpu.memory_space<vmem>>, %arg7: memref<32x64xf32, #tpu.memory_space<vmem>>, %arg8: memref<1x64xf32, #tpu.memory_space<vmem>>, %arg9: memref<64x32xf32, #tpu.memory_space<vmem>>, %arg10: memref<1x32xf32, #tpu.memory_space<vmem>>, %arg11: memref<1x32xf32, #tpu.memory_space<vmem>>, %arg12: memref<1x32xf32, #tpu.memory_space<vmem>>, %arg13: memref<32x32xf32, #tpu.memory_space<vmem>>, %arg14: memref<32x32xf32, #tpu.memory_space<vmem>>, %arg15: memref<16x32xf32, #tpu.memory_space<vmem>>) attributes {dimension_semantics = [], scalar_prefetch = 0 : i64, scratch_operands = 0 : i64, tpu.core_type = #tpu.core_type<tc>} {
    %c0 = arith.constant 0 : index
    %c0_0 = arith.constant 0 : index
    %0 = vector.load %arg0[%c0, %c0_0] : memref<16x32xf32, #tpu.memory_space<vmem>>, vector<16x32xf32>
    %c0_1 = arith.constant 0 : index
    %c0_2 = arith.constant 0 : index
    %1 = vector.load %arg1[%c0_1, %c0_2] : memref<32x96xf32, #tpu.memory_space<vmem>>, vector<32x96xf32>
    %cst = arith.constant dense<0.000000e+00> : vector<16x96xf32>
    %2 = tpu.matmul %0, %1, %cst {dimension_numbers = #tpu.dot_dimension_numbers<[1], [0], [0], [1], [0, 0, 1, 1], [], []>} : vector<16x32xf32>, vector<32x96xf32>, vector<16x96xf32> -> vector<16x96xf32>
    %c0_3 = arith.constant 0 : index
    %c0_4 = arith.constant 0 : index
    %3 = vector.load %arg2[%c0_3, %c0_4] : memref<1x96xf32, #tpu.memory_space<vmem>>, vector<1x96xf32>
    %4 = vector.broadcast %3 : vector<1x96xf32> to vector<16x96xf32>
    %5 = arith.addf %2, %4 : vector<16x96xf32>
    %6 = vector.extract_strided_slice %5 {offsets = [0, 0], sizes = [16, 32], strides = [1, 1]} : vector<16x96xf32> to vector<16x32xf32>
    %cst_5 = arith.constant 0.353553385 : f32
    %7 = vector.broadcast %cst_5 : f32 to vector<16x32xf32>
    %8 = arith.mulf %6, %7 : vector<16x32xf32>
    %9 = vector.extract_strided_slice %5 {offsets = [0, 32], sizes = [16, 32], strides = [1, 1]} : vector<16x96xf32> to vector<16x32xf32>
    %10 = vector.extract_strided_slice %5 {offsets = [0, 64], sizes = [16, 32], strides = [1, 1]} : vector<16x96xf32> to vector<16x32xf32>
    %c0_6 = arith.constant 0 : index
    %c0_7 = arith.constant 0 : index
    %11 = vector.load %arg13[%c0_6, %c0_7] : memref<32x32xf32, #tpu.memory_space<vmem>>, vector<32x32xf32>
    %c0_8 = arith.constant 0 : index
    %c0_9 = arith.constant 0 : index
    %12 = vector.load %arg14[%c0_8, %c0_9] : memref<32x32xf32, #tpu.memory_space<vmem>>, vector<32x32xf32>
    %13 = vector.extract_strided_slice %8 {offsets = [0, 0], sizes = [8, 32], strides = [1, 1]} : vector<16x32xf32> to vector<8x32xf32>
    %14 = vector.extract_strided_slice %9 {offsets = [0, 0], sizes = [8, 32], strides = [1, 1]} : vector<16x32xf32> to vector<8x32xf32>
    %15 = tpu.concatenate %14, %14, %14, %14 in 0 : vector<8x32xf32>, vector<8x32xf32>, vector<8x32xf32>, vector<8x32xf32> -> vector<32x32xf32>
    %16 = arith.mulf %15, %11 : vector<32x32xf32>
    %17 = vector.extract_strided_slice %10 {offsets = [0, 0], sizes = [8, 32], strides = [1, 1]} : vector<16x32xf32> to vector<8x32xf32>
    %18 = tpu.concatenate %17, %17, %17, %17 in 0 : vector<8x32xf32>, vector<8x32xf32>, vector<8x32xf32>, vector<8x32xf32> -> vector<32x32xf32>
    %19 = arith.mulf %18, %11 : vector<32x32xf32>
    %cst_10 = arith.constant dense<0.000000e+00> : vector<8x32xf32>
    %20 = tpu.matmul %13, %16, %cst_10 {dimension_numbers = #tpu.dot_dimension_numbers<[1], [1], [0], [0], [0, 0, 1, 0], [], []>} : vector<8x32xf32>, vector<32x32xf32>, vector<8x32xf32> -> vector<8x32xf32>
    %cst_11 = arith.constant dense<0xFF800000> : vector<8xf32>
    %21 = vector.multi_reduction <maximumf>, %20, %cst_11 [1] : vector<8x32xf32> to vector<8xf32>
    %22 = vector.shape_cast %21 : vector<8xf32> to vector<8x1xf32>
    %23 = vector.broadcast %22 : vector<8x1xf32> to vector<8x32xf32>
    %24 = arith.subf %20, %23 : vector<8x32xf32>
    %25 = math.exp %24 : vector<8x32xf32>
    %cst_12 = arith.constant dense<0.000000e+00> : vector<8x32xf32>
    %26 = tpu.matmul %25, %12, %cst_12 {dimension_numbers = #tpu.dot_dimension_numbers<[1], [0], [0], [1], [0, 0, 1, 1], [], []>} : vector<8x32xf32>, vector<32x32xf32>, vector<8x32xf32> -> vector<8x32xf32>
    %27 = arith.divf %25, %26 : vector<8x32xf32>
    %cst_13 = arith.constant dense<0.000000e+00> : vector<8x32xf32>
    %28 = tpu.matmul %27, %19, %cst_13 {dimension_numbers = #tpu.dot_dimension_numbers<[1], [0], [0], [1], [0, 0, 1, 1], [], []>} : vector<8x32xf32>, vector<32x32xf32>, vector<8x32xf32> -> vector<8x32xf32>
    %29 = vector.extract_strided_slice %8 {offsets = [8, 0], sizes = [8, 32], strides = [1, 1]} : vector<16x32xf32> to vector<8x32xf32>
    %30 = vector.extract_strided_slice %9 {offsets = [8, 0], sizes = [8, 32], strides = [1, 1]} : vector<16x32xf32> to vector<8x32xf32>
    %31 = tpu.concatenate %30, %30, %30, %30 in 0 : vector<8x32xf32>, vector<8x32xf32>, vector<8x32xf32>, vector<8x32xf32> -> vector<32x32xf32>
    %32 = arith.mulf %31, %11 : vector<32x32xf32>
    %33 = vector.extract_strided_slice %10 {offsets = [8, 0], sizes = [8, 32], strides = [1, 1]} : vector<16x32xf32> to vector<8x32xf32>
    %34 = tpu.concatenate %33, %33, %33, %33 in 0 : vector<8x32xf32>, vector<8x32xf32>, vector<8x32xf32>, vector<8x32xf32> -> vector<32x32xf32>
    %35 = arith.mulf %34, %11 : vector<32x32xf32>
    %cst_14 = arith.constant dense<0.000000e+00> : vector<8x32xf32>
    %36 = tpu.matmul %29, %32, %cst_14 {dimension_numbers = #tpu.dot_dimension_numbers<[1], [1], [0], [0], [0, 0, 1, 0], [], []>} : vector<8x32xf32>, vector<32x32xf32>, vector<8x32xf32> -> vector<8x32xf32>
    %cst_15 = arith.constant dense<0xFF800000> : vector<8xf32>
    %37 = vector.multi_reduction <maximumf>, %36, %cst_15 [1] : vector<8x32xf32> to vector<8xf32>
    %38 = vector.shape_cast %37 : vector<8xf32> to vector<8x1xf32>
    %39 = vector.broadcast %38 : vector<8x1xf32> to vector<8x32xf32>
    %40 = arith.subf %36, %39 : vector<8x32xf32>
    %41 = math.exp %40 : vector<8x32xf32>
    %cst_16 = arith.constant dense<0.000000e+00> : vector<8x32xf32>
    %42 = tpu.matmul %41, %12, %cst_16 {dimension_numbers = #tpu.dot_dimension_numbers<[1], [0], [0], [1], [0, 0, 1, 1], [], []>} : vector<8x32xf32>, vector<32x32xf32>, vector<8x32xf32> -> vector<8x32xf32>
    %43 = arith.divf %41, %42 : vector<8x32xf32>
    %cst_17 = arith.constant dense<0.000000e+00> : vector<8x32xf32>
    %44 = tpu.matmul %43, %35, %cst_17 {dimension_numbers = #tpu.dot_dimension_numbers<[1], [0], [0], [1], [0, 0, 1, 1], [], []>} : vector<8x32xf32>, vector<32x32xf32>, vector<8x32xf32> -> vector<8x32xf32>
    %45 = tpu.concatenate %28, %44 in 0 : vector<8x32xf32>, vector<8x32xf32> -> vector<16x32xf32>
    %c0_18 = arith.constant 0 : index
    %c0_19 = arith.constant 0 : index
    %46 = vector.load %arg3[%c0_18, %c0_19] : memref<32x32xf32, #tpu.memory_space<vmem>>, vector<32x32xf32>
    %cst_20 = arith.constant dense<0.000000e+00> : vector<16x32xf32>
    %47 = tpu.matmul %45, %46, %cst_20 {dimension_numbers = #tpu.dot_dimension_numbers<[1], [0], [0], [1], [0, 0, 1, 1], [], []>} : vector<16x32xf32>, vector<32x32xf32>, vector<16x32xf32> -> vector<16x32xf32>
    %c0_21 = arith.constant 0 : index
    %c0_22 = arith.constant 0 : index
    %48 = vector.load %arg4[%c0_21, %c0_22] : memref<1x32xf32, #tpu.memory_space<vmem>>, vector<1x32xf32>
    %49 = vector.broadcast %48 : vector<1x32xf32> to vector<16x32xf32>
    %50 = arith.addf %47, %49 : vector<16x32xf32>
    %51 = arith.addf %50, %0 : vector<16x32xf32>
    %c0_23 = arith.constant 0 : index
    %c0_24 = arith.constant 0 : index
    %52 = vector.load %arg5[%c0_23, %c0_24] : memref<1x32xf32, #tpu.memory_space<vmem>>, vector<1x32xf32>
    %c0_25 = arith.constant 0 : index
    %c0_26 = arith.constant 0 : index
    %53 = vector.load %arg6[%c0_25, %c0_26] : memref<1x32xf32, #tpu.memory_space<vmem>>, vector<1x32xf32>
    %cst_27 = arith.constant dense<0.000000e+00> : vector<16xf32>
    %54 = vector.multi_reduction <add>, %51, %cst_27 [1] : vector<16x32xf32> to vector<16xf32>
    %55 = vector.shape_cast %54 : vector<16xf32> to vector<16x1xf32>
    %cst_28 = arith.constant 3.200000e+01 : f32
    %56 = vector.broadcast %cst_28 : f32 to vector<16x1xf32>
    %57 = arith.divf %55, %56 : vector<16x1xf32>
    %58 = vector.broadcast %57 : vector<16x1xf32> to vector<16x32xf32>
    %59 = arith.subf %51, %58 : vector<16x32xf32>
    %60 = arith.mulf %59, %59 : vector<16x32xf32>
    %cst_29 = arith.constant dense<0.000000e+00> : vector<16xf32>
    %61 = vector.multi_reduction <add>, %60, %cst_29 [1] : vector<16x32xf32> to vector<16xf32>
    %62 = vector.shape_cast %61 : vector<16xf32> to vector<16x1xf32>
    %cst_30 = arith.constant 3.200000e+01 : f32
    %63 = vector.broadcast %cst_30 : f32 to vector<16x1xf32>
    %64 = arith.divf %62, %63 : vector<16x1xf32>
    %65 = vector.broadcast %57 : vector<16x1xf32> to vector<16x32xf32>
    %66 = arith.subf %51, %65 : vector<16x32xf32>
    %cst_31 = arith.constant 9.99999974E-6 : f32
    %67 = vector.broadcast %cst_31 : f32 to vector<16x1xf32>
    %68 = arith.addf %64, %67 : vector<16x1xf32>
    %69 = math.rsqrt %68 : vector<16x1xf32>
    %70 = vector.broadcast %69 : vector<16x1xf32> to vector<16x32xf32>
    %71 = arith.mulf %66, %70 : vector<16x32xf32>
    %72 = vector.broadcast %52 : vector<1x32xf32> to vector<16x32xf32>
    %73 = arith.mulf %71, %72 : vector<16x32xf32>
    %74 = vector.broadcast %53 : vector<1x32xf32> to vector<16x32xf32>
    %75 = arith.addf %73, %74 : vector<16x32xf32>
    %c0_32 = arith.constant 0 : index
    %c0_33 = arith.constant 0 : index
    %76 = vector.load %arg7[%c0_32, %c0_33] : memref<32x64xf32, #tpu.memory_space<vmem>>, vector<32x64xf32>
    %cst_34 = arith.constant dense<0.000000e+00> : vector<16x64xf32>
    %77 = tpu.matmul %75, %76, %cst_34 {dimension_numbers = #tpu.dot_dimension_numbers<[1], [0], [0], [1], [0, 0, 1, 1], [], []>} : vector<16x32xf32>, vector<32x64xf32>, vector<16x64xf32> -> vector<16x64xf32>
    %c0_35 = arith.constant 0 : index
    %c0_36 = arith.constant 0 : index
    %78 = vector.load %arg8[%c0_35, %c0_36] : memref<1x64xf32, #tpu.memory_space<vmem>>, vector<1x64xf32>
    %79 = vector.broadcast %78 : vector<1x64xf32> to vector<16x64xf32>
    %80 = arith.addf %77, %79 : vector<16x64xf32>
    %cst_37 = arith.constant 5.000000e-01 : f32
    %81 = vector.broadcast %cst_37 : f32 to vector<16x64xf32>
    %82 = arith.mulf %81, %80 : vector<16x64xf32>
    %cst_38 = arith.constant 0.707106769 : f32
    %83 = vector.broadcast %cst_38 : f32 to vector<16x64xf32>
    %84 = arith.mulf %80, %83 : vector<16x64xf32>
    %85 = math.erf %84 : vector<16x64xf32>
    %cst_39 = arith.constant 1.000000e+00 : f32
    %86 = vector.broadcast %cst_39 : f32 to vector<16x64xf32>
    %87 = arith.addf %86, %85 : vector<16x64xf32>
    %88 = arith.mulf %82, %87 : vector<16x64xf32>
    %c0_40 = arith.constant 0 : index
    %c0_41 = arith.constant 0 : index
    %89 = vector.load %arg9[%c0_40, %c0_41] : memref<64x32xf32, #tpu.memory_space<vmem>>, vector<64x32xf32>
    %cst_42 = arith.constant dense<0.000000e+00> : vector<16x32xf32>
    %90 = tpu.matmul %88, %89, %cst_42 {dimension_numbers = #tpu.dot_dimension_numbers<[1], [0], [0], [1], [0, 0, 1, 1], [], []>} : vector<16x64xf32>, vector<64x32xf32>, vector<16x32xf32> -> vector<16x32xf32>
    %c0_43 = arith.constant 0 : index
    %c0_44 = arith.constant 0 : index
    %91 = vector.load %arg10[%c0_43, %c0_44] : memref<1x32xf32, #tpu.memory_space<vmem>>, vector<1x32xf32>
    %92 = vector.broadcast %91 : vector<1x32xf32> to vector<16x32xf32>
    %93 = arith.addf %90, %92 : vector<16x32xf32>
    %94 = arith.addf %93, %75 : vector<16x32xf32>
    %c0_45 = arith.constant 0 : index
    %c0_46 = arith.constant 0 : index
    %95 = vector.load %arg11[%c0_45, %c0_46] : memref<1x32xf32, #tpu.memory_space<vmem>>, vector<1x32xf32>
    %c0_47 = arith.constant 0 : index
    %c0_48 = arith.constant 0 : index
    %96 = vector.load %arg12[%c0_47, %c0_48] : memref<1x32xf32, #tpu.memory_space<vmem>>, vector<1x32xf32>
    %cst_49 = arith.constant dense<0.000000e+00> : vector<16xf32>
    %97 = vector.multi_reduction <add>, %94, %cst_49 [1] : vector<16x32xf32> to vector<16xf32>
    %98 = vector.shape_cast %97 : vector<16xf32> to vector<16x1xf32>
    %cst_50 = arith.constant 3.200000e+01 : f32
    %99 = vector.broadcast %cst_50 : f32 to vector<16x1xf32>
    %100 = arith.divf %98, %99 : vector<16x1xf32>
    %101 = vector.broadcast %100 : vector<16x1xf32> to vector<16x32xf32>
    %102 = arith.subf %94, %101 : vector<16x32xf32>
    %103 = arith.mulf %102, %102 : vector<16x32xf32>
    %cst_51 = arith.constant dense<0.000000e+00> : vector<16xf32>
    %104 = vector.multi_reduction <add>, %103, %cst_51 [1] : vector<16x32xf32> to vector<16xf32>
    %105 = vector.shape_cast %104 : vector<16xf32> to vector<16x1xf32>
    %cst_52 = arith.constant 3.200000e+01 : f32
    %106 = vector.broadcast %cst_52 : f32 to vector<16x1xf32>
    %107 = arith.divf %105, %106 : vector<16x1xf32>
    %108 = vector.broadcast %100 : vector<16x1xf32> to vector<16x32xf32>
    %109 = arith.subf %94, %108 : vector<16x32xf32>
    %cst_53 = arith.constant 9.99999974E-6 : f32
    %110 = vector.broadcast %cst_53 : f32 to vector<16x1xf32>
    %111 = arith.addf %107, %110 : vector<16x1xf32>
    %112 = math.rsqrt %111 : vector<16x1xf32>
    %113 = vector.broadcast %112 : vector<16x1xf32> to vector<16x32xf32>
    %114 = arith.mulf %109, %113 : vector<16x32xf32>
    %115 = vector.broadcast %95 : vector<1x32xf32> to vector<16x32xf32>
    %116 = arith.mulf %114, %115 : vector<16x32xf32>
    %117 = vector.broadcast %96 : vector<1x32xf32> to vector<16x32xf32>
    %118 = arith.addf %116, %117 : vector<16x32xf32>
    %c0_54 = arith.constant 0 : index
    %c0_55 = arith.constant 0 : index
    %119 = vector.load %arg15[%c0_54, %c0_55] : memref<16x32xf32, #tpu.memory_space<vmem>>, vector<16x32xf32>
    tpu.vector_store %arg15[%c0_54, %c0_55], %118 {strides = array<i32>} : memref<16x32xf32, #tpu.memory_space<vmem>>, vector<16x32xf32>,
    return
  }
}

</mosaic_0001>

<llo_original>
// kernel: tpu_custom_call.1
$region0: #{tpu_custom_call.1}
  #allocation0 [shape = 'u32[]', space=smem, size = 0x4, offset = 0x4, fixed_abs, tag = 'smem constant byte address 0x4 - core index']
  #allocation1 [shape = 'u32[144,128]{1,0:T(1,128)}', space=vmem, size = 0x12000, scoped, tag = 'internal scratch']
  %s0 = inlined_call_operand.hbm [shape: f32[16,32], index: 0, kind: input, shape index: {}]
  %s1 = inlined_call_operand.vmem [shape: f32[32,96], index: 1, kind: input, shape index: {}]
  %s2 = inlined_call_operand.vmem [shape: f32[1,96], index: 2, kind: input, shape index: {}]
  %s3 = inlined_call_operand.vmem [shape: f32[32,32], index: 3, kind: input, shape index: {}]
  %s4 = inlined_call_operand.vmem [shape: f32[1,32], index: 4, kind: input, shape index: {}]
  %s5 = inlined_call_operand.hbm [shape: f32[1,32], index: 5, kind: input, shape index: {}]
  %s6 = inlined_call_operand.hbm [shape: f32[1,32], index: 6, kind: input, shape index: {}]
  %s7 = inlined_call_operand.vmem [shape: f32[32,64], index: 7, kind: input, shape index: {}]
  %s8 = inlined_call_operand.hbm [shape: f32[1,64], index: 8, kind: input, shape index: {}]
  %s9 = inlined_call_operand.vmem [shape: f32[64,32], index: 9, kind: input, shape index: {}]
  %s10 = inlined_call_operand.vmem [shape: f32[1,32], index: 10, kind: input, shape index: {}]
  %s11 = inlined_call_operand.vmem [shape: f32[1,32], index: 11, kind: input, shape index: {}]
  %s12 = inlined_call_operand.vmem [shape: f32[1,32], index: 12, kind: input, shape index: {}]
  %s13 = inlined_call_operand.hbm [shape: f32[32,32], index: 13, kind: input, shape index: {}]
  %s14 = inlined_call_operand.hbm [shape: f32[32,32], index: 14, kind: input, shape index: {}]
  %s15 = inlined_call_operand.hbm [shape: f32[16,32], index: 15, kind: output, shape index: {}]
  %s16 = sld [smem:[#allocation0]]
  $region94: #{tpu_custom_call.1} parent=0
    _
  %s18 = ssub.s32 1, %s16
  %s19 = scalar_select 0, %s18, %s16
  $region1: #{tpu_custom_call.1} parent=0
    #allocation2 [shape = 'u8[8192]{0}', space=vmem, size = 0x2000, scoped, tag = 'input window, operand 0, single buffered']
    #allocation3 [shape = 's32[1]{0}', space=sflag, size = 0x4, scoped, tag = 'scoped memory for tpu_custom_call.1']
    #allocation4 [shape = 's32[1]{0}', space=sflag, size = 0x4, scoped, tag = 'scoped memory for tpu_custom_call.1']
    #allocation5 [shape = 'u8[512]{0}', space=vmem, size = 0x400, scoped, tag = 'input window, operand 5, single buffered']
    #allocation6 [shape = 's32[1]{0}', space=sflag, size = 0x4, scoped, tag = 'scoped memory for tpu_custom_call.1']
    #allocation7 [shape = 'u8[512]{0}', space=vmem, size = 0x400, scoped, tag = 'input window, operand 6, single buffered']
    #allocation8 [shape = 'u8[512]{0}', space=vmem, size = 0x400, scoped, tag = 'input window, operand 8, single buffered']
    #allocation9 [shape = 's32[1]{0}', space=sflag, size = 0x4, scoped, tag = 'scoped memory for tpu_custom_call.1']
    #allocation10 [shape = 'u8[16384]{0}', space=vmem, size = 0x4000, scoped, tag = 'input window, operand 13, single buffered']
    #allocation11 [shape = 'u8[16384]{0}', space=vmem, size = 0x4000, scoped, tag = 'input window, operand 14, single buffered']
    #allocation12 [shape = 's32[1]{0}', space=sflag, size = 0x4, scoped, tag = 'scoped memory for tpu_custom_call.1']
    #allocation13 [shape = 'u8[8192]{0}', space=vmem, size = 0x2000, scoped, tag = 'output window, operand 0, single buffered']
    %20 = vsyncpa [#allocation3], 0
    %21 = vsyncpa [#allocation6], 0
    %22 = vsyncpa [#allocation9], 0
    %23 = vsyncpa [#allocation12], 0
    %24 = vsyncpa [#allocation4], 0
    // Predicated region
    $region2: #{tpu_custom_call.1} parent=1 // pred_check
      _
    $region3: #{tpu_custom_call.1} parent=1 // pred_check_branch
      %26 = sbr.rel (0) target = $region5
    $region4: #{tpu_custom_call.1} parent=1 // pred_region
      %s28 = ssub.s32 256, 256
      %29 = vsyncadd [#allocation3], %s28
      %s30 = sshll.u32 [#allocation2], 4
      %s31 = int_to_ptr.vmem [resolvable:$true] %s30
      %36 = dma.hbm_to_vmem [thread:$0]  %s0, 256, %s31, [#allocation3], 128, 128, 8
    $region5: #{tpu_custom_call.1} parent=1 // pred_fallthru
      _
    // Predicated region
    $region6: #{tpu_custom_call.1} parent=1 // pred_check
      _
    $region7: #{tpu_custom_call.1} parent=1 // pred_check_branch
      %38 = sbr.rel (0) target = $region9
    $region8: #{tpu_custom_call.1} parent=1 // pred_region
      _
    $region9: #{tpu_custom_call.1} parent=1 // pred_fallthru
      _
    // Predicated region
    $region10: #{tpu_custom_call.1} parent=1 // pred_check
      _
    $region11: #{tpu_custom_call.1} parent=1 // pred_check_branch
      %40 = sbr.rel (0) target = $region13
    $region12: #{tpu_custom_call.1} parent=1 // pred_region
      _
    $region13: #{tpu_custom_call.1} parent=1 // pred_fallthru
      _
    // Predicated region
    $region14: #{tpu_custom_call.1} parent=1 // pred_check
      _
    $region15: #{tpu_custom_call.1} parent=1 // pred_check_branch
      %42 = sbr.rel (0) target = $region17
    $region16: #{tpu_custom_call.1} parent=1 // pred_region
      _
    $region17: #{tpu_custom_call.1} parent=1 // pred_fallthru
      _
    // Predicated region
    $region18: #{tpu_custom_call.1} parent=1 // pred_check
      _
    $region19: #{tpu_custom_call.1} parent=1 // pred_check_branch
      %44 = sbr.rel (0) target = $region21
    $region20: #{tpu_custom_call.1} parent=1 // pred_region
      _
    $region21: #{tpu_custom_call.1} parent=1 // pred_fallthru
      _
    // Predicated region
    $region22: #{tpu_custom_call.1} parent=1 // pred_check
      _
    $region23: #{tpu_custom_call.1} parent=1 // pred_check_branch
      %46 = sbr.rel (0) target = $region25
    $region24: #{tpu_custom_call.1} parent=1 // pred_region
      %s48 = ssub.s32 16, 16
      %49 = vsyncadd [#allocation6], %s48
      %s51 = sshll.u32 [#allocation5], 4
      %s52 = int_to_ptr.vmem [resolvable:$true] %s51
      %54 = dma.hbm_to_vmem [thread:$0]  %s5, 16, %s52, [#allocation6]
    $region25: #{tpu_custom_call.1} parent=1 // pred_fallthru
      _
    // Predicated region
    $region26: #{tpu_custom_call.1} parent=1 // pred_check
      _
    $region27: #{tpu_custom_call.1} parent=1 // pred_check_branch
      %56 = sbr.rel (0) target = $region29
    $region28: #{tpu_custom_call.1} parent=1 // pred_region
      %s58 = ssub.s32 16, 16
      %59 = vsyncadd [#allocation6], %s58
      %s61 = sshll.u32 [#allocation7], 4
      %s62 = int_to_ptr.vmem [resolvable:$true] %s61
      %64 = dma.hbm_to_vmem [thread:$0]  %s6, 16, %s62, [#allocation6]
    $region29: #{tpu_custom_call.1} parent=1 // pred_fallthru
      _
    // Predicated region
    $region30: #{tpu_custom_call.1} parent=1 // pred_check
      _
    $region31: #{tpu_custom_call.1} parent=1 // pred_check_branch
      %66 = sbr.rel (0) target = $region33
    $region32: #{tpu_custom_call.1} parent=1 // pred_region
      _
    $region33: #{tpu_custom_call.1} parent=1 // pred_fallthru
      _
    // Predicated region
    $region34: #{tpu_custom_call.1} parent=1 // pred_check
      _
    $region35: #{tpu_custom_call.1} parent=1 // pred_check_branch
      %68 = sbr.rel (0) target = $region37
    $region36: #{tpu_custom_call.1} parent=1 // pred_region
      %s70 = ssub.s32 16, 16
      %71 = vsyncadd [#allocation9], %s70
      %s73 = sshll.u32 [#allocation8], 4
      %s74 = int_to_ptr.vmem [resolvable:$true] %s73
      %76 = dma.hbm_to_vmem [thread:$0]  %s8, 16, %s74, [#allocation9]
    $region37: #{tpu_custom_call.1} parent=1 // pred_fallthru
      _
    // Predicated region
    $region38: #{tpu_custom_call.1} parent=1 // pred_check
      _
    $region39: #{tpu_custom_call.1} parent=1 // pred_check_branch
      %78 = sbr.rel (0) target = $region41
    $region40: #{tpu_custom_call.1} parent=1 // pred_region
      _
    $region41: #{tpu_custom_call.1} parent=1 // pred_fallthru
      _
    // Predicated region
    $region42: #{tpu_custom_call.1} parent=1 // pred_check
      _
    $region43: #{tpu_custom_call.1} parent=1 // pred_check_branch
      %80 = sbr.rel (0) target = $region45
    $region44: #{tpu_custom_call.1} parent=1 // pred_region
      _
    $region45: #{tpu_custom_call.1} parent=1 // pred_fallthru
      _
    // Predicated region
    $region46: #{tpu_custom_call.1} parent=1 // pred_check
      _
    $region47: #{tpu_custom_call.1} parent=1 // pred_check_branch
      %82 = sbr.rel (0) target = $region49
    $region48: #{tpu_custom_call.1} parent=1 // pred_region
      _
    $region49: #{tpu_custom_call.1} parent=1 // pred_fallthru
      _
    // Predicated region
    $region50: #{tpu_custom_call.1} parent=1 // pred_check
      _
    $region51: #{tpu_custom_call.1} parent=1 // pred_check_branch
      %84 = sbr.rel (0) target = $region53
    $region52: #{tpu_custom_call.1} parent=1 // pred_region
      _
    $region53: #{tpu_custom_call.1} parent=1 // pred_fallthru
      _
    // Predicated region
    $region54: #{tpu_custom_call.1} parent=1 // pred_check
      _
    $region55: #{tpu_custom_call.1} parent=1 // pred_check_branch
      %86 = sbr.rel (0) target = $region57
    $region56: #{tpu_custom_call.1} parent=1 // pred_region
      %s88 = ssub.s32 512, 512
      %89 = vsyncadd [#allocation9], %s88
      %s90 = sshll.u32 [#allocation10], 4
      %s91 = int_to_ptr.vmem [resolvable:$true] %s90
      %96 = dma.hbm_to_vmem [thread:$0]  %s13, 512, %s91, [#allocation9], 128, 128, 8
    $region57: #{tpu_custom_call.1} parent=1 // pred_fallthru
      _
    // Predicated region
    $region58: #{tpu_custom_call.1} parent=1 // pred_check
      _
    $region59: #{tpu_custom_call.1} parent=1 // pred_check_branch
      %98 = sbr.rel (0) target = $region61
    $region60: #{tpu_custom_call.1} parent=1 // pred_region
      %s100 = ssub.s32 512, 512
      %101 = vsyncadd [#allocation12], %s100
      %s102 = sshll.u32 [#allocation11], 4
      %s103 = int_to_ptr.vmem [resolvable:$true] %s102
      %108 = dma.hbm_to_vmem [thread:$0]  %s14, 512, %s103, [#allocation12], 128, 128, 8
    $region61: #{tpu_custom_call.1} parent=1 // pred_fallthru
      _
    // Predicated region
    $region62: #{tpu_custom_call.1} parent=1 // pred_check
      _
    $region63: #{tpu_custom_call.1} parent=1 // pred_check_branch
      %110 = sbr.rel (0) target = $region65
    $region64: #{tpu_custom_call.1} parent=1 // pred_region
      %111 = dma.done [#allocation3], 256
    $region65: #{tpu_custom_call.1} parent=1 // pred_fallthru
      _
    // Predicated region
    $region66: #{tpu_custom_call.1} parent=1 // pred_check
      _
    $region67: #{tpu_custom_call.1} parent=1 // pred_check_branch
      %113 = sbr.rel (0) target = $region69
    $region68: #{tpu_custom_call.1} parent=1 // pred_region
      %114 = dma.done [#allocation6], 16
    $region69: #{tpu_custom_call.1} parent=1 // pred_fallthru
      _
    // Predicated region
    $region70: #{tpu_custom_call.1} parent=1 // pred_check
      _
    $region71: #{tpu_custom_call.1} parent=1 // pred_check_branch
      %116 = sbr.rel (0) target = $region73
    $region72: #{tpu_custom_call.1} parent=1 // pred_region
      %117 = dma.done [#allocation6], 16
    $region73: #{tpu_custom_call.1} parent=1 // pred_fallthru
      _
    // Predicated region
    $region74: #{tpu_custom_call.1} parent=1 // pred_check
      _
    $region75: #{tpu_custom_call.1} parent=1 // pred_check_branch
      %119 = sbr.rel (0) target = $region77
    $region76: #{tpu_custom_call.1} parent=1 // pred_region
      %120 = dma.done [#allocation9], 16
    $region77: #{tpu_custom_call.1} parent=1 // pred_fallthru
      _
    // Predicated region
    $region78: #{tpu_custom_call.1} parent=1 // pred_check
      _
    $region79: #{tpu_custom_call.1} parent=1 // pred_check_branch
      %122 = sbr.rel (0) target = $region81
    $region80: #{tpu_custom_call.1} parent=1 // pred_region
      %123 = dma.done [#allocation9], 512
    $region81: #{tpu_custom_call.1} parent=1 // pred_fallthru
      _
    // Predicated region
    $region82: #{tpu_custom_call.1} parent=1 // pred_check
      _
    $region83: #{tpu_custom_call.1} parent=1 // pred_check_branch
      %125 = sbr.rel (0) target = $region85
    $region84: #{tpu_custom_call.1} parent=1 // pred_region
      %126 = dma.done [#allocation12], 512
    $region85: #{tpu_custom_call.1} parent=1 // pred_fallthru
      _
    %v127 = vld [vmem:[#allocation2] sm:$0xff]
    %v128 = vld [vmem:[#allocation2 + $0x8] sm:$0xff]
    %v129 = vld [vmem:[%s1] sm:$0xff]
    %v130 = vld [vmem:[%s1 + $0x8] sm:$0xff]
    %v131 = vld [vmem:[%s1 + $0x10] sm:$0xff]
    %v132 = vld [vmem:[%s1 + $0x18] sm:$0xff]
    %v133 = vld [vmem:[%s2] sm:$0x1]
    %v135 = vlaneseq
    %v136 = vshrl.u32 %v135, 7
    %v137 = vsub.s32 0, %v136
    %v138 = vrot.slane %v133, %v137
    %vm140 = vcmask 261120
    %v142 = vsel %vm140, %v127, 0
    %v145 = vsel %vm140, %v128, 0
    %147 = vmatprep.subr.mxu0 0.0
    %148 = vmatpush1.msra.mxu0 %v129
    %149 = vmatprep.subr.mxu0 0.0
    %150 = vmatpush1.msra.mxu0 %v130
    %151 = vmatprep.subr.mxu0 0.0
    %152 = vmatpush1.msra.mxu0 %v131
    %153 = vmatprep.subr.mxu0 0.0
    %154 = vmatpush1.msra.mxu0 %v132
    %155 = vmatprep.subr.mxu0 0.0
    %156 = vmatpush1.msra.mxu0 0.0
    %157 = vmatprep.subr.mxu0 0.0
    %158 = vmatpush1.msra.mxu0 0.0
    %159 = vmatprep.subr.mxu0 0.0
    %160 = vmatpush1.msra.mxu0 0.0
    %161 = vmatprep.subr.mxu0 0.0
    %162 = vmatpush1.msra.mxu0 0.0
    %163 = vmatprep.subr.mxu0 0.0
    %164 = vmatpush1.msra.mxu0 0.0
    %165 = vmatprep.subr.mxu0 0.0
    %166 = vmatpush1.msra.mxu0 0.0
    %167 = vmatprep.subr.mxu0 0.0
    %168 = vmatpush1.msra.mxu0 0.0
    %169 = vmatprep.subr.mxu0 0.0
    %170 = vmatpush1.msra.mxu0 0.0
    %171 = vmatprep.subr.mxu0 0.0
    %172 = vmatpush1.msra.mxu0 0.0
    %173 = vmatprep.subr.mxu0 0.0
    %174 = vmatpush1.msra.mxu0 0.0
    %175 = vmatprep.subr.mxu0 0.0
    %176 = vmatpush1.msra.mxu0 0.0
    %177 = vmatprep.subr.mxu0 0.0
    %178 = vmatpush1.msra.mxu0 0.0
    %179 = vmatprep.subr.mxu0 0.0
    %180 = vmatpush1.msra.mxu0 0.0
    %181 = vmatprep.subr.mxu0 0.0
    %182 = vmatpush1.msra.mxu0 0.0
    %183 = vmatprep.subr.mxu0 0.0
    %184 = vmatpush1.msra.mxu0 0.0
    %185 = vmatprep.subr.mxu0 0.0
    %186 = vmatpush1.msra.mxu0 0.0
    %187 = vmatprep.subr.mxu0 0.0
    %188 = vmatpush1.msra.mxu0 0.0
    %189 = vmatprep.subr.mxu0 0.0
    %190 = vmatpush1.msra.mxu0 0.0
    %191 = vmatprep.subr.mxu0 0.0
    %192 = vmatpush1.msra.mxu0 0.0
    %193 = vmatprep.subr.mxu0 0.0
    %194 = vmatpush1.msra.mxu0 0.0
    %195 = vmatprep.subr.mxu0 0.0
    %196 = vmatpush1.msra.mxu0 0.0
    %197 = vmatprep.subr.mxu0 0.0
    %198 = vmatpush1.msra.mxu0 0.0
    %199 = vmatprep.subr.mxu0 0.0
    %200 = vmatpush1.msra.mxu0 0.0
    %201 = vmatprep.subr.mxu0 0.0
    %202 = vmatpush1.msra.mxu0 0.0
    %203 = vmatprep.subr.mxu0 0.0
    %204 = vmatpush1.msra.mxu0 0.0
    %205 = vmatprep.subr.mxu0 0.0
    %206 = vmatpush1.msra.mxu0 0.0
    %207 = vmatprep.subr.mxu0 0.0
    %208 = vmatpush1.msra.mxu0 0.0
    %209 = vmatprep.subr.mxu0 0.0
    %210 = vmatpush1.msra.mxu0 0.0
    %211 = vmatprep.mubr.f32.mxu0 0.0
    %212 = vmatmul.mubr.f32.gmra.mrb[0].mxu0 %v142
    %v213 = vpop.f32.mrb[0].mxu0
    %v214 = vadd.f32 %v138, %v213
    %v215 = vpop.f32.mrb[0].mxu0
    %216 = vmatprep.mubr.f32.mxu0 0.0
    %217 = vmatmul.mubr.f32.gmra.mrb[0].mxu0 %v145
    %v218 = vpop.f32.mrb[0].mxu0
    %v219 = vadd.f32 %v138, %v218
    %v220 = vpop.f32.mrb[0].mxu0
    %221 = vdwg.mxu0
    %v222 = vmul.f32 %v214, 0.35355338
    %v223 = vmul.f32 %v219, 0.35355338
    %v224 = vld [vmem:[#allocation10] sm:$0xff]
    %v225 = vld [vmem:[#allocation10 + $0x8] sm:$0xff]
    %v226 = vld [vmem:[#allocation10 + $0x10] sm:$0xff]
    %v227 = vld [vmem:[#allocation10 + $0x18] sm:$0xff]
    %v228 = vld [vmem:[#allocation11] sm:$0xff]
    %v229 = vld [vmem:[#allocation11 + $0x8] sm:$0xff]
    %v230 = vld [vmem:[#allocation11 + $0x10] sm:$0xff]
    %v231 = vld [vmem:[#allocation11 + $0x18] sm:$0xff]
    %236 = vrot.lane.b32.xlu0 %v224, 32
    %v237 = vpop.permute.xlu0 %236
    %238 = vrot.lane.b32.xlu0 %v225, 32
    %v239 = vpop.permute.xlu0 %238
    %240 = vrot.lane.b32.xlu0 %v226, 32
    %v241 = vpop.permute.xlu0 %240
    %242 = vrot.lane.b32.xlu0 %v227, 32
    %v243 = vpop.permute.xlu0 %242
    %v248 = vmul.f32 %v214, %v237
    %v249 = vmul.f32 %v214, %v239
    %v250 = vmul.f32 %v214, %v241
    %v251 = vmul.f32 %v214, %v243
    %252 = vrot.lane.b32.xlu0 %v224, 64
    %v253 = vpop.permute.xlu0 %252
    %254 = vrot.lane.b32.xlu0 %v225, 64
    %v255 = vpop.permute.xlu0 %254
    %256 = vrot.lane.b32.xlu0 %v226, 64
    %v257 = vpop.permute.xlu0 %256
    %258 = vrot.lane.b32.xlu0 %v227, 64
    %v259 = vpop.permute.xlu0 %258
    %v264 = vmul.f32 %v214, %v253
    %v265 = vmul.f32 %v214, %v255
    %v266 = vmul.f32 %v214, %v257
    %v267 = vmul.f32 %v214, %v259
    %272 = vrot.lane.b32.xlu0 %v248, 96
    %v273 = vpop.permute.xlu0 %272
    %274 = vrot.lane.b32.xlu0 %v249, 96
    %v275 = vpop.permute.xlu0 %274
    %276 = vrot.lane.b32.xlu0 %v250, 96
    %v277 = vpop.permute.xlu0 %276
    %278 = vrot.lane.b32.xlu0 %v251, 96
    %v279 = vpop.permute.xlu0 %278
    %v281 = vsel %vm140, %v222, 0
    %v283 = vsel %vm140, %v273, 0
    %v285 = vsel %vm140, %v275, 0
    %v287 = vsel %vm140, %v277, 0
    %v289 = vsel %vm140, %v279, 0
    %291 = vmatprep.subr.mxu0 0.0
    %292 = vmatpush1.xpose.msra.mxu0 %v283
    %293 = vmatprep.subr.mxu0 0.0
    %294 = vmatpush1.xpose.msra.mxu0 %v285
    %295 = vmatprep.subr.mxu0 0.0
    %296 = vmatpush1.xpose.msra.mxu0 %v287
    %297 = vmatprep.subr.mxu0 0.0
    %298 = vmatpush1.xpose.msra.mxu0 %v289
    %299 = vmatprep.subr.mxu0 0.0
    %300 = vmatpush1.xpose.msra.mxu0 0.0
    %301 = vmatprep.subr.mxu0 0.0
    %302 = vmatpush1.xpose.msra.mxu0 0.0
    %303 = vmatprep.subr.mxu0 0.0
    %304 = vmatpush1.xpose.msra.mxu0 0.0
    %305 = vmatprep.subr.mxu0 0.0
    %306 = vmatpush1.xpose.msra.mxu0 0.0
    %307 = vmatprep.subr.mxu0 0.0
    %308 = vmatpush1.xpose.msra.mxu0 0.0
    %309 = vmatprep.subr.mxu0 0.0
    %310 = vmatpush1.xpose.msra.mxu0 0.0
    %311 = vmatprep.subr.mxu0 0.0
    %312 = vmatpush1.xpose.msra.mxu0 0.0
    %313 = vmatprep.subr.mxu0 0.0
    %314 = vmatpush1.xpose.msra.mxu0 0.0
    %315 = vmatprep.subr.mxu0 0.0
    %316 = vmatpush1.xpose.msra.mxu0 0.0
    %317 = vmatprep.subr.mxu0 0.0
    %318 = vmatpush1.xpose.msra.mxu0 0.0
    %319 = vmatprep.subr.mxu0 0.0
    %320 = vmatpush1.xpose.msra.mxu0 0.0
    %321 = vmatprep.subr.mxu0 0.0
    %322 = vmatpush1.xpose.msra.mxu0 0.0
    %323 = vmatprep.subr.mxu0 0.0
    %324 = vmatpush1.xpose.msra.mxu0 0.0
    %325 = vmatprep.subr.mxu0 0.0
    %326 = vmatpush1.xpose.msra.mxu0 0.0
    %327 = vmatprep.subr.mxu0 0.0
    %328 = vmatpush1.xpose.msra.mxu0 0.0
    %329 = vmatprep.subr.mxu0 0.0
    %330 = vmatpush1.xpose.msra.mxu0 0.0
    %331 = vmatprep.subr.mxu0 0.0
    %332 = vmatpush1.xpose.msra.mxu0 0.0
    %333 = vmatprep.subr.mxu0 0.0
    %334 = vmatpush1.xpose.msra.mxu0 0.0
    %335 = vmatprep.subr.mxu0 0.0
    %336 = vmatpush1.xpose.msra.mxu0 0.0
    %337 = vmatprep.subr.mxu0 0.0
    %338 = vmatpush1.xpose.msra.mxu0 0.0
    %339 = vmatprep.subr.mxu0 0.0
    %340 = vmatpush1.xpose.msra.mxu0 0.0
    %341 = vmatprep.subr.mxu0 0.0
    %342 = vmatpush1.xpose.msra.mxu0 0.0
    %343 = vmatprep.subr.mxu0 0.0
    %344 = vmatpush1.xpose.msra.mxu0 0.0
    %345 = vmatprep.subr.mxu0 0.0
    %346 = vmatpush1.xpose.msra.mxu0 0.0
    %347 = vmatprep.subr.mxu0 0.0
    %348 = vmatpush1.xpose.msra.mxu0 0.0
    %349 = vmatprep.subr.mxu0 0.0
    %350 = vmatpush1.xpose.msra.mxu0 0.0
    %351 = vmatprep.subr.mxu0 0.0
    %352 = vmatpush1.xpose.msra.mxu0 0.0
    %353 = vmatprep.subr.mxu0 0.0
    %354 = vmatpush1.xpose.msra.mxu0 0.0
    %355 = vmatprep.mubr.f32.mxu0 0.0
    %356 = vmatmul.mubr.f32.gmra.mrb[0].mxu0 %v281
    %v357 = vpop.f32.mrb[0].mxu0
    %v358 = vadd.f32 0.0, %v357
    %v359 = vpop.f32.mrb[0].mxu0
    %360 = vdwg.mxu0
    %v361 = vsel %vm140, %v358, -inf
    %362 = vmax.xlane.f32.xlu0 %v361
    %v363 = vpop.xlane.xlu0 %362
    %v364 = vsub.f32 %v358, %v363
    %v365 = vmul.f32 %v364, 1.442695
    %v366 = vpow.pop %v365
    %v368 = vsel %vm140, %v366, 0
    %370 = vmatprep.subr.mxu0 0.0
    %371 = vmatpush1.msra.mxu0 %v228
    %372 = vmatprep.subr.mxu0 0.0
    %373 = vmatpush1.msra.mxu0 %v229
    %374 = vmatprep.subr.mxu0 0.0
    %375 = vmatpush1.msra.mxu0 %v230
    %376 = vmatprep.subr.mxu0 0.0
    %377 = vmatpush1.msra.mxu0 %v231
    %378 = vmatprep.subr.mxu0 0.0
    %379 = vmatpush1.msra.mxu0 0.0
    %380 = vmatprep.subr.mxu0 0.0
    %381 = vmatpush1.msra.mxu0 0.0
    %382 = vmatprep.subr.mxu0 0.0
    %383 = vmatpush1.msra.mxu0 0.0
    %384 = vmatprep.subr.mxu0 0.0
    %385 = vmatpush1.msra.mxu0 0.0
    %386 = vmatprep.subr.mxu0 0.0
    %387 = vmatpush1.msra.mxu0 0.0
    %388 = vmatprep.subr.mxu0 0.0
    %389 = vmatpush1.msra.mxu0 0.0
    %390 = vmatprep.subr.mxu0 0.0
    %391 = vmatpush1.msra.mxu0 0.0
    %392 = vmatprep.subr.mxu0 0.0
    %393 = vmatpush1.msra.mxu0 0.0
    %394 = vmatprep.subr.mxu0 0.0
    %395 = vmatpush1.msra.mxu0 0.0
    %396 = vmatprep.subr.mxu0 0.0
    %397 = vmatpush1.msra.mxu0 0.0
    %398 = vmatprep.subr.mxu0 0.0
    %399 = vmatpush1.msra.mxu0 0.0
    %400 = vmatprep.subr.mxu0 0.0
    %401 = vmatpush1.msra.mxu0 0.0
    %402 = vmatprep.subr.mxu0 0.0
    %403 = vmatpush1.msra.mxu0 0.0
    %404 = vmatprep.subr.mxu0 0.0
    %405 = vmatpush1.msra.mxu0 0.0
    %406 = vmatprep.subr.mxu0 0.0
    %407 = vmatpush1.msra.mxu0 0.0
    %408 = vmatprep.subr.mxu0 0.0
    %409 = vmatpush1.msra.mxu0 0.0
    %410 = vmatprep.subr.mxu0 0.0
    %411 = vmatpush1.msra.mxu0 0.0
    %412 = vmatprep.subr.mxu0 0.0
    %413 = vmatpush1.msra.mxu0 0.0
    %414 = vmatprep.subr.mxu0 0.0
    %415 = vmatpush1.msra.mxu0 0.0
    %416 = vmatprep.subr.mxu0 0.0
    %417 = vmatpush1.msra.mxu0 0.0
    %418 = vmatprep.subr.mxu0 0.0
    %419 = vmatpush1.msra.mxu0 0.0
    %420 = vmatprep.subr.mxu0 0.0
    %421 = vmatpush1.msra.mxu0 0.0
    %422 = vmatprep.subr.mxu0 0.0
    %423 = vmatpush1.msra.mxu0 0.0
    %424 = vmatprep.subr.mxu0 0.0
    %425 = vmatpush1.msra.mxu0 0.0
    %426 = vmatprep.subr.mxu0 0.0
    %427 = vmatpush1.msra.mxu0 0.0
    %428 = vmatprep.subr.mxu0 0.0
    %429 = vmatpush1.msra.mxu0 0.0
    %430 = vmatprep.subr.mxu0 0.0
    %431 = vmatpush1.msra.mxu0 0.0
    %432 = vmatprep.subr.mxu0 0.0
    %433 = vmatpush1.msra.mxu0 0.0
    %434 = vmatprep.mubr.f32.mxu0 0.0
    %435 = vmatmul.mubr.f32.gmra.mrb[0].mxu0 %v368
    %v436 = vpop.f32.mrb[0].mxu0
    %v437 = vadd.f32 0.0, %v436
    %v438 = vpop.f32.mrb[0].mxu0
    %439 = vdwg.mxu0
    %v440 = vrcp.pop %v437
    %v441 = vmul.f32 %v366, %v440
    %446 = vrot.lane.b32.xlu0 %v264, 64
    %v447 = vpop.permute.xlu0 %446
    %448 = vrot.lane.b32.xlu0 %v265, 64
    %v449 = vpop.permute.xlu0 %448
    %450 = vrot.lane.b32.xlu0 %v266, 64
    %v451 = vpop.permute.xlu0 %450
    %452 = vrot.lane.b32.xlu0 %v267, 64
    %v453 = vpop.permute.xlu0 %452
    %v459 = vsel %vm140, %v441, 0
    %461 = vmatprep.subr.mxu0 0.0
    %462 = vmatpush1.msra.mxu0 %v447
    %463 = vmatprep.subr.mxu0 0.0
    %464 = vmatpush1.msra.mxu0 %v449
    %465 = vmatprep.subr.mxu0 0.0
    %466 = vmatpush1.msra.mxu0 %v451
    %467 = vmatprep.subr.mxu0 0.0
    %468 = vmatpush1.msra.mxu0 %v453
    %469 = vmatprep.subr.mxu0 0.0
    %470 = vmatpush1.msra.mxu0 0.0
    %471 = vmatprep.subr.mxu0 0.0
    %472 = vmatpush1.msra.mxu0 0.0
    %473 = vmatprep.subr.mxu0 0.0
    %474 = vmatpush1.msra.mxu0 0.0
    %475 = vmatprep.subr.mxu0 0.0
    %476 = vmatpush1.msra.mxu0 0.0
    %477 = vmatprep.subr.mxu0 0.0
    %478 = vmatpush1.msra.mxu0 0.0
    %479 = vmatprep.subr.mxu0 0.0
    %480 = vmatpush1.msra.mxu0 0.0
    %481 = vmatprep.subr.mxu0 0.0
    %482 = vmatpush1.msra.mxu0 0.0
    %483 = vmatprep.subr.mxu0 0.0
    %484 = vmatpush1.msra.mxu0 0.0
    %485 = vmatprep.subr.mxu0 0.0
    %486 = vmatpush1.msra.mxu0 0.0
    %487 = vmatprep.subr.mxu0 0.0
    %488 = vmatpush1.msra.mxu0 0.0
    %489 = vmatprep.subr.mxu0 0.0
    %490 = vmatpush1.msra.mxu0 0.0
    %491 = vmatprep.subr.mxu0 0.0
    %492 = vmatpush1.msra.mxu0 0.0
    %493 = vmatprep.subr.mxu0 0.0
    %494 = vmatpush1.msra.mxu0 0.0
    %495 = vmatprep.subr.mxu0 0.0
    %496 = vmatpush1.msra.mxu0 0.0
    %497 = vmatprep.subr.mxu0 0.0
    %498 = vmatpush1.msra.mxu0 0.0
    %499 = vmatprep.subr.mxu0 0.0
    %500 = vmatpush1.msra.mxu0 0.0
    %501 = vmatprep.subr.mxu0 0.0
    %502 = vmatpush1.msra.mxu0 0.0
    %503 = vmatprep.subr.mxu0 0.0
    %504 = vmatpush1.msra.mxu0 0.0
    %505 = vmatprep.subr.mxu0 0.0
    %506 = vmatpush1.msra.mxu0 0.0
    %507 = vmatprep.subr.mxu0 0.0
    %508 = vmatpush1.msra.mxu0 0.0
    %509 = vmatprep.subr.mxu0 0.0
    %510 = vmatpush1.msra.mxu0 0.0
    %511 = vmatprep.subr.mxu0 0.0
    %512 = vmatpush1.msra.mxu0 0.0
    %513 = vmatprep.subr.mxu0 0.0
    %514 = vmatpush1.msra.mxu0 0.0
    %515 = vmatprep.subr.mxu0 0.0
    %516 = vmatpush1.msra.mxu0 0.0
    %517 = vmatprep.subr.mxu0 0.0
    %518 = vmatpush1.msra.mxu0 0.0
    %519 = vmatprep.subr.mxu0 0.0
    %520 = vmatpush1.msra.mxu0 0.0
    %521 = vmatprep.subr.mxu0 0.0
    %522 = vmatpush1.msra.mxu0 0.0
    %523 = vmatprep.subr.mxu0 0.0
    %524 = vmatpush1.msra.mxu0 0.0
    %525 = vmatprep.mubr.f32.mxu0 0.0
    %526 = vmatmul.mubr.f32.gmra.mrb[0].mxu0 %v459
    %v527 = vpop.f32.mrb[0].mxu0
    %v528 = vadd.f32 0.0, %v527
    %v529 = vpop.f32.mrb[0].mxu0
    %530 = vdwg.mxu0
    %v531 = vmul.f32 %v219, %v237
    %v532 = vmul.f32 %v219, %v239
    %v533 = vmul.f32 %v219, %v241
    %v534 = vmul.f32 %v219, %v243
    %v535 = vmul.f32 %v219, %v253
    %v536 = vmul.f32 %v219, %v255
    %v537 = vmul.f32 %v219, %v257
    %v538 = vmul.f32 %v219, %v259
    %543 = vrot.lane.b32.xlu0 %v531, 96
    %v544 = vpop.permute.xlu0 %543
    %545 = vrot.lane.b32.xlu0 %v532, 96
    %v546 = vpop.permute.xlu0 %545
    %547 = vrot.lane.b32.xlu0 %v533, 96
    %v548 = vpop.permute.xlu0 %547
    %549 = vrot.lane.b32.xlu0 %v534, 96
    %v550 = vpop.permute.xlu0 %549
    %v552 = vsel %vm140, %v223, 0
    %v554 = vsel %vm140, %v544, 0
    %v556 = vsel %vm140, %v546, 0
    %v558 = vsel %vm140, %v548, 0
    %v560 = vsel %vm140, %v550, 0
    %562 = vmatprep.subr.mxu0 0.0
    %563 = vmatpush1.xpose.msra.mxu0 %v554
    %564 = vmatprep.subr.mxu0 0.0
    %565 = vmatpush1.xpose.msra.mxu0 %v556
    %566 = vmatprep.subr.mxu0 0.0
    %567 = vmatpush1.xpose.msra.mxu0 %v558
    %568 = vmatprep.subr.mxu0 0.0
    %569 = vmatpush1.xpose.msra.mxu0 %v560
    %570 = vmatprep.subr.mxu0 0.0
    %571 = vmatpush1.xpose.msra.mxu0 0.0
    %572 = vmatprep.subr.mxu0 0.0
    %573 = vmatpush1.xpose.msra.mxu0 0.0
    %574 = vmatprep.subr.mxu0 0.0
    %575 = vmatpush1.xpose.msra.mxu0 0.0
    %576 = vmatprep.subr.mxu0 0.0
    %577 = vmatpush1.xpose.msra.mxu0 0.0
    %578 = vmatprep.subr.mxu0 0.0
    %579 = vmatpush1.xpose.msra.mxu0 0.0
    %580 = vmatprep.subr.mxu0 0.0
    %581 = vmatpush1.xpose.msra.mxu0 0.0
    %582 = vmatprep.subr.mxu0 0.0
    %583 = vmatpush1.xpose.msra.mxu0 0.0
    %584 = vmatprep.subr.mxu0 0.0
    %585 = vmatpush1.xpose.msra.mxu0 0.0
    %586 = vmatprep.subr.mxu0 0.0
    %587 = vmatpush1.xpose.msra.mxu0 0.0
    %588 = vmatprep.subr.mxu0 0.0
    %589 = vmatpush1.xpose.msra.mxu0 0.0
    %590 = vmatprep.subr.mxu0 0.0
    %591 = vmatpush1.xpose.msra.mxu0 0.0
    %592 = vmatprep.subr.mxu0 0.0
    %593 = vmatpush1.xpose.msra.mxu0 0.0
    %594 = vmatprep.subr.mxu0 0.0
    %595 = vmatpush1.xpose.msra.mxu0 0.0
    %596 = vmatprep.subr.mxu0 0.0
    %597 = vmatpush1.xpose.msra.mxu0 0.0
    %598 = vmatprep.subr.mxu0 0.0
    %599 = vmatpush1.xpose.msra.mxu0 0.0
    %600 = vmatprep.subr.mxu0 0.0
    %601 = vmatpush1.xpose.msra.mxu0 0.0
    %602 = vmatprep.subr.mxu0 0.0
    %603 = vmatpush1.xpose.msra.mxu0 0.0
    %604 = vmatprep.subr.mxu0 0.0
    %605 = vmatpush1.xpose.msra.mxu0 0.0
    %606 = vmatprep.subr.mxu0 0.0
    %607 = vmatpush1.xpose.msra.mxu0 0.0
    %608 = vmatprep.subr.mxu0 0.0
    %609 = vmatpush1.xpose.msra.mxu0 0.0
    %610 = vmatprep.subr.mxu0 0.0
    %611 = vmatpush1.xpose.msra.mxu0 0.0
    %612 = vmatprep.subr.mxu0 0.0
    %613 = vmatpush1.xpose.msra.mxu0 0.0
    %614 = vmatprep.subr.mxu0 0.0
    %615 = vmatpush1.xpose.msra.mxu0 0.0
    %616 = vmatprep.subr.mxu0 0.0
    %617 = vmatpush1.xpose.msra.mxu0 0.0
    %618 = vmatprep.subr.mxu0 0.0
    %619 = vmatpush1.xpose.msra.mxu0 0.0
    %620 = vmatprep.subr.mxu0 0.0
    %621 = vmatpush1.xpose.msra.mxu0 0.0
    %622 = vmatprep.subr.mxu0 0.0
    %623 = vmatpush1.xpose.msra.mxu0 0.0
    %624 = vmatprep.subr.mxu0 0.0
    %625 = vmatpush1.xpose.msra.mxu0 0.0
    %626 = vmatprep.mubr.f32.mxu0 0.0
    %627 = vmatmul.mubr.f32.gmra.mrb[0].mxu0 %v552
    %v628 = vpop.f32.mrb[0].mxu0
    %v629 = vadd.f32 0.0, %v628
    %v630 = vpop.f32.mrb[0].mxu0
    %631 = vdwg.mxu0
    %v632 = vsel %vm140, %v629, -inf
    %633 = vmax.xlane.f32.xlu0 %v632
    %v634 = vpop.xlane.xlu0 %633
    %v635 = vsub.f32 %v629, %v634
    %v636 = vmul.f32 %v635, 1.442695
    %v637 = vpow.pop %v636
    %v639 = vsel %vm140, %v637, 0
    %641 = vmatprep.subr.mxu0 0.0
    %642 = vmatpush1.msra.mxu0 %v228
    %643 = vmatprep.subr.mxu0 0.0
    %644 = vmatpush1.msra.mxu0 %v229
    %645 = vmatprep.subr.mxu0 0.0
    %646 = vmatpush1.msra.mxu0 %v230
    %647 = vmatprep.subr.mxu0 0.0
    %648 = vmatpush1.msra.mxu0 %v231
    %649 = vmatprep.subr.mxu0 0.0
    %650 = vmatpush1.msra.mxu0 0.0
    %651 = vmatprep.subr.mxu0 0.0
    %652 = vmatpush1.msra.mxu0 0.0
    %653 = vmatprep.subr.mxu0 0.0
    %654 = vmatpush1.msra.mxu0 0.0
    %655 = vmatprep.subr.mxu0 0.0
    %656 = vmatpush1.msra.mxu0 0.0
    %657 = vmatprep.subr.mxu0 0.0
    %658 = vmatpush1.msra.mxu0 0.0
    %659 = vmatprep.subr.mxu0 0.0
    %660 = vmatpush1.msra.mxu0 0.0
    %661 = vmatprep.subr.mxu0 0.0
    %662 = vmatpush1.msra.mxu0 0.0
    %663 = vmatprep.subr.mxu0 0.0
    %664 = vmatpush1.msra.mxu0 0.0
    %665 = vmatprep.subr.mxu0 0.0
    %666 = vmatpush1.msra.mxu0 0.0
    %667 = vmatprep.subr.mxu0 0.0
    %668 = vmatpush1.msra.mxu0 0.0
    %669 = vmatprep.subr.mxu0 0.0
    %670 = vmatpush1.msra.mxu0 0.0
    %671 = vmatprep.subr.mxu0 0.0
    %672 = vmatpush1.msra.mxu0 0.0
    %673 = vmatprep.subr.mxu0 0.0
    %674 = vmatpush1.msra.mxu0 0.0
    %675 = vmatprep.subr.mxu0 0.0
    %676 = vmatpush1.msra.mxu0 0.0
    %677 = vmatprep.subr.mxu0 0.0
    %678 = vmatpush1.msra.mxu0 0.0
    %679 = vmatprep.subr.mxu0 0.0
    %680 = vmatpush1.msra.mxu0 0.0
    %681 = vmatprep.subr.mxu0 0.0
    %682 = vmatpush1.msra.mxu0 0.0
    %683 = vmatprep.subr.mxu0 0.0
    %684 = vmatpush1.msra.mxu0 0.0
    %685 = vmatprep.subr.mxu0 0.0
    %686 = vmatpush1.msra.mxu0 0.0
    %687 = vmatprep.subr.mxu0 0.0
    %688 = vmatpush1.msra.mxu0 0.0
    %689 = vmatprep.subr.mxu0 0.0
    %690 = vmatpush1.msra.mxu0 0.0
    %691 = vmatprep.subr.mxu0 0.0
    %692 = vmatpush1.msra.mxu0 0.0
    %693 = vmatprep.subr.mxu0 0.0
    %694 = vmatpush1.msra.mxu0 0.0
    %695 = vmatprep.subr.mxu0 0.0
    %696 = vmatpush1.msra.mxu0 0.0
    %697 = vmatprep.subr.mxu0 0.0
    %698 = vmatpush1.msra.mxu0 0.0
    %699 = vmatprep.subr.mxu0 0.0
    %700 = vmatpush1.msra.mxu0 0.0
    %701 = vmatprep.subr.mxu0 0.0
    %702 = vmatpush1.msra.mxu0 0.0
    %703 = vmatprep.subr.mxu0 0.0
    %704 = vmatpush1.msra.mxu0 0.0
    %705 = vmatprep.mubr.f32.mxu0 0.0
    %706 = vmatmul.mubr.f32.gmra.mrb[0].mxu0 %v639
    %v707 = vpop.f32.mrb[0].mxu0
    %v708 = vadd.f32 0.0, %v707
    %v709 = vpop.f32.mrb[0].mxu0
    %710 = vdwg.mxu0
    %v711 = vrcp.pop %v708
    %v712 = vmul.f32 %v637, %v711
    %717 = vrot.lane.b32.xlu0 %v535, 64
    %v718 = vpop.permute.xlu0 %717
    %719 = vrot.lane.b32.xlu0 %v536, 64
    %v720 = vpop.permute.xlu0 %719
    %721 = vrot.lane.b32.xlu0 %v537, 64
    %v722 = vpop.permute.xlu0 %721
    %723 = vrot.lane.b32.xlu0 %v538, 64
    %v724 = vpop.permute.xlu0 %723
    %v730 = vsel %vm140, %v712, 0
    %732 = vmatprep.subr.mxu0 0.0
    %733 = vmatpush1.msra.mxu0 %v718
    %734 = vmatprep.subr.mxu0 0.0
    %735 = vmatpush1.msra.mxu0 %v720
    %736 = vmatprep.subr.mxu0 0.0
    %737 = vmatpush1.msra.mxu0 %v722
    %738 = vmatprep.subr.mxu0 0.0
    %739 = vmatpush1.msra.mxu0 %v724
    %740 = vmatprep.subr.mxu0 0.0
    %741 = vmatpush1.msra.mxu0 0.0
    %742 = vmatprep.subr.mxu0 0.0
    %743 = vmatpush1.msra.mxu0 0.0
    %744 = vmatprep.subr.mxu0 0.0
    %745 = vmatpush1.msra.mxu0 0.0
    %746 = vmatprep.subr.mxu0 0.0
    %747 = vmatpush1.msra.mxu0 0.0
    %748 = vmatprep.subr.mxu0 0.0
    %749 = vmatpush1.msra.mxu0 0.0
    %750 = vmatprep.subr.mxu0 0.0
    %751 = vmatpush1.msra.mxu0 0.0
    %752 = vmatprep.subr.mxu0 0.0
    %753 = vmatpush1.msra.mxu0 0.0
    %754 = vmatprep.subr.mxu0 0.0
    %755 = vmatpush1.msra.mxu0 0.0
    %756 = vmatprep.subr.mxu0 0.0
    %757 = vmatpush1.msra.mxu0 0.0
    %758 = vmatprep.subr.mxu0 0.0
    %759 = vmatpush1.msra.mxu0 0.0
    %760 = vmatprep.subr.mxu0 0.0
    %761 = vmatpush1.msra.mxu0 0.0
    %762 = vmatprep.subr.mxu0 0.0
    %763 = vmatpush1.msra.mxu0 0.0
    %764 = vmatprep.subr.mxu0 0.0
    %765 = vmatpush1.msra.mxu0 0.0
    %766 = vmatprep.subr.mxu0 0.0
    %767 = vmatpush1.msra.mxu0 0.0
    %768 = vmatprep.subr.mxu0 0.0
    %769 = vmatpush1.msra.mxu0 0.0
    %770 = vmatprep.subr.mxu0 0.0
    %771 = vmatpush1.msra.mxu0 0.0
    %772 = vmatprep.subr.mxu0 0.0
    %773 = vmatpush1.msra.mxu0 0.0
    %774 = vmatprep.subr.mxu0 0.0
    %775 = vmatpush1.msra.mxu0 0.0
    %776 = vmatprep.subr.mxu0 0.0
    %777 = vmatpush1.msra.mxu0 0.0
    %778 = vmatprep.subr.mxu0 0.0
    %779 = vmatpush1.msra.mxu0 0.0
    %780 = vmatprep.subr.mxu0 0.0
    %781 = vmatpush1.msra.mxu0 0.0
    %782 = vmatprep.subr.mxu0 0.0
    %783 = vmatpush1.msra.mxu0 0.0
    %784 = vmatprep.subr.mxu0 0.0
    %785 = vmatpush1.msra.mxu0 0.0
    %786 = vmatprep.subr.mxu0 0.0
    %787 = vmatpush1.msra.mxu0 0.0
    %788 = vmatprep.subr.mxu0 0.0
    %789 = vmatpush1.msra.mxu0 0.0
    %790 = vmatprep.subr.mxu0 0.0
    %791 = vmatpush1.msra.mxu0 0.0
    %792 = vmatprep.subr.mxu0 0.0
    %793 = vmatpush1.msra.mxu0 0.0
    %794 = vmatprep.subr.mxu0 0.0
    %795 = vmatpush1.msra.mxu0 0.0
    %796 = vmatprep.mubr.f32.mxu0 0.0
    %797 = vmatmul.mubr.f32.gmra.mrb[0].mxu0 %v730
    %v798 = vpop.f32.mrb[0].mxu0
    %v799 = vadd.f32 0.0, %v798
    %v800 = vpop.f32.mrb[0].mxu0
    %801 = vdwg.mxu0
    %v802 = vld [vmem:[%s3] sm:$0xff]
    %v803 = vld [vmem:[%s3 + $0x8] sm:$0xff]
    %v804 = vld [vmem:[%s3 + $0x10] sm:$0xff]
    %v805 = vld [vmem:[%s3 + $0x18] sm:$0xff]
    %v806 = vld [vmem:[%s4] sm:$0x1]
    %v808 = vlaneseq
    %v809 = vshrl.u32 %v808, 7
    %v810 = vsub.s32 0, %v809
    %v811 = vrot.slane %v806, %v810
    %v814 = vsel %vm140, %v528, 0
    %v817 = vsel %vm140, %v799, 0
    %819 = vmatprep.subr.mxu0 0.0
    %820 = vmatpush1.msra.mxu0 %v802
    %821 = vmatprep.subr.mxu0 0.0
    %822 = vmatpush1.msra.mxu0 %v803
    %823 = vmatprep.subr.mxu0 0.0
    %824 = vmatpush1.msra.mxu0 %v804
    %825 = vmatprep.subr.mxu0 0.0
    %826 = vmatpush1.msra.mxu0 %v805
    %827 = vmatprep.subr.mxu0 0.0
    %828 = vmatpush1.msra.mxu0 0.0
    %829 = vmatprep.subr.mxu0 0.0
    %830 = vmatpush1.msra.mxu0 0.0
    %831 = vmatprep.subr.mxu0 0.0
    %832 = vmatpush1.msra.mxu0 0.0
    %833 = vmatprep.subr.mxu0 0.0
    %834 = vmatpush1.msra.mxu0 0.0
    %835 = vmatprep.subr.mxu0 0.0
    %836 = vmatpush1.msra.mxu0 0.0
    %837 = vmatprep.subr.mxu0 0.0
    %838 = vmatpush1.msra.mxu0 0.0
    %839 = vmatprep.subr.mxu0 0.0
    %840 = vmatpush1.msra.mxu0 0.0
    %841 = vmatprep.subr.mxu0 0.0
    %842 = vmatpush1.msra.mxu0 0.0
    %843 = vmatprep.subr.mxu0 0.0
    %844 = vmatpush1.msra.mxu0 0.0
    %845 = vmatprep.subr.mxu0 0.0
    %846 = vmatpush1.msra.mxu0 0.0
    %847 = vmatprep.subr.mxu0 0.0
    %848 = vmatpush1.msra.mxu0 0.0
    %849 = vmatprep.subr.mxu0 0.0
    %850 = vmatpush1.msra.mxu0 0.0
    %851 = vmatprep.subr.mxu0 0.0
    %852 = vmatpush1.msra.mxu0 0.0
    %853 = vmatprep.subr.mxu0 0.0
    %854 = vmatpush1.msra.mxu0 0.0
    %855 = vmatprep.subr.mxu0 0.0
    %856 = vmatpush1.msra.mxu0 0.0
    %857 = vmatprep.subr.mxu0 0.0
    %858 = vmatpush1.msra.mxu0 0.0
    %859 = vmatprep.subr.mxu0 0.0
    %860 = vmatpush1.msra.mxu0 0.0
    %861 = vmatprep.subr.mxu0 0.0
    %862 = vmatpush1.msra.mxu0 0.0
    %863 = vmatprep.subr.mxu0 0.0
    %864 = vmatpush1.msra.mxu0 0.0
    %865 = vmatprep.subr.mxu0 0.0
    %866 = vmatpush1.msra.mxu0 0.0
    %867 = vmatprep.subr.mxu0 0.0
    %868 = vmatpush1.msra.mxu0 0.0
    %869 = vmatprep.subr.mxu0 0.0
    %870 = vmatpush1.msra.mxu0 0.0
    %871 = vmatprep.subr.mxu0 0.0
    %872 = vmatpush1.msra.mxu0 0.0
    %873 = vmatprep.subr.mxu0 0.0
    %874 = vmatpush1.msra.mxu0 0.0
    %875 = vmatprep.subr.mxu0 0.0
    %876 = vmatpush1.msra.mxu0 0.0
    %877 = vmatprep.subr.mxu0 0.0
    %878 = vmatpush1.msra.mxu0 0.0
    %879 = vmatprep.subr.mxu0 0.0
    %880 = vmatpush1.msra.mxu0 0.0
    %881 = vmatprep.subr.mxu0 0.0
    %882 = vmatpush1.msra.mxu0 0.0
    %883 = vmatprep.mubr.f32.mxu0 0.0
    %884 = vmatmul.mubr.f32.gmra.mrb[0].mxu0 %v814
    %v885 = vpop.f32.mrb[0].mxu0
    %v886 = vadd.f32 %v811, %v885
    %v887 = vpop.f32.mrb[0].mxu0
    %888 = vmatprep.mubr.f32.mxu0 0.0
    %889 = vmatmul.mubr.f32.gmra.mrb[0].mxu0 %v817
    %v890 = vpop.f32.mrb[0].mxu0
    %v891 = vadd.f32 %v811, %v890
    %v892 = vpop.f32.mrb[0].mxu0
    %893 = vdwg.mxu0
    %v894 = vadd.f32 %v886, %v127
    %v895 = vadd.f32 %v891, %v128
    %v896 = vld [vmem:[#allocation5] sm:$0x1]
    %v897 = vld [vmem:[#allocation7] sm:$0x1]
    %v898 = vsel %vm140, %v894, 0.0
    %899 = vadd.xlane.f32.xlu0 %v898
    %v900 = vpop.xlane.xlu0 %899
    %v901 = vsel %vm140, %v895, 0.0
    %902 = vadd.xlane.f32.xlu0 %v901
    %v903 = vpop.xlane.xlu0 %902
    %v904 = vrcp.pop 32.0
    %v905 = vmul.f32 %v900, %v904
    %v906 = vmul.f32 %v903, %v904
    %v907 = vsub.f32 %v894, %v905
    %v908 = vsub.f32 %v895, %v906
    %v909 = vmul.f32 %v907, %v907
    %v910 = vmul.f32 %v908, %v908
    %v911 = vsel %vm140, %v909, 0.0
    %912 = vadd.xlane.f32.xlu0 %v911
    %v913 = vpop.xlane.xlu0 %912
    %v914 = vsel %vm140, %v910, 0.0
    %915 = vadd.xlane.f32.xlu0 %v914
    %v916 = vpop.xlane.xlu0 %915
    %v917 = vmul.f32 %v913, %v904
    %v918 = vmul.f32 %v916, %v904
    %v919 = vadd.f32 %v917, 1e-05
    %v920 = vadd.f32 %v918, 1e-05
    %v921 = vrsqrt.pop %v919
    %v922 = vrsqrt.pop %v920
    %v923 = vmul.f32 %v907, %v921
    %v924 = vmul.f32 %v908, %v922
    %v926 = vlaneseq
    %v927 = vshrl.u32 %v926, 7
    %v928 = vsub.s32 0, %v927
    %v929 = vrot.slane %v896, %v928
    %v931 = vmul.f32 %v923, %v929
    %v932 = vmul.f32 %v924, %v929
    %v934 = vlaneseq
    %v935 = vshrl.u32 %v934, 7
    %v936 = vsub.s32 0, %v935
    %v937 = vrot.slane %v897, %v936
    %v939 = vadd.f32 %v931, %v937
    %v940 = vadd.f32 %v932, %v937
    %v941 = vld [vmem:[%s7] sm:$0xff]
    %v942 = vld [vmem:[%s7 + $0x8] sm:$0xff]
    %v943 = vld [vmem:[%s7 + $0x10] sm:$0xff]
    %v944 = vld [vmem:[%s7 + $0x18] sm:$0xff]
    %v945 = vld [vmem:[#allocation8] sm:$0x1]
    %v947 = vlaneseq
    %v948 = vshrl.u32 %v947, 7
    %v949 = vsub.s32 0, %v948
    %v950 = vrot.slane %v945, %v949
    %v953 = vsel %vm140, %v939, 0
    %v956 = vsel %vm140, %v940, 0
    %958 = vmatprep.subr.mxu0 0.0
    %959 = vmatpush1.msra.mxu0 %v941
    %960 = vmatprep.subr.mxu0 0.0
    %961 = vmatpush1.msra.mxu0 %v942
    %962 = vmatprep.subr.mxu0 0.0
    %963 = vmatpush1.msra.mxu0 %v943
    %964 = vmatprep.subr.mxu0 0.0
    %965 = vmatpush1.msra.mxu0 %v944
    %966 = vmatprep.subr.mxu0 0.0
    %967 = vmatpush1.msra.mxu0 0.0
    %968 = vmatprep.subr.mxu0 0.0
    %969 = vmatpush1.msra.mxu0 0.0
    %970 = vmatprep.subr.mxu0 0.0
    %971 = vmatpush1.msra.mxu0 0.0
    %972 = vmatprep.subr.mxu0 0.0
    %973 = vmatpush1.msra.mxu0 0.0
    %974 = vmatprep.subr.mxu0 0.0
    %975 = vmatpush1.msra.mxu0 0.0
    %976 = vmatprep.subr.mxu0 0.0
    %977 = vmatpush1.msra.mxu0 0.0
    %978 = vmatprep.subr.mxu0 0.0
    %979 = vmatpush1.msra.mxu0 0.0
    %980 = vmatprep.subr.mxu0 0.0
    %981 = vmatpush1.msra.mxu0 0.0
    %982 = vmatprep.subr.mxu0 0.0
    %983 = vmatpush1.msra.mxu0 0.0
    %984 = vmatprep.subr.mxu0 0.0
    %985 = vmatpush1.msra.mxu0 0.0
    %986 = vmatprep.subr.mxu0 0.0
    %987 = vmatpush1.msra.mxu0 0.0
    %988 = vmatprep.subr.mxu0 0.0
    %989 = vmatpush1.msra.mxu0 0.0
    %990 = vmatprep.subr.mxu0 0.0
    %991 = vmatpush1.msra.mxu0 0.0
    %992 = vmatprep.subr.mxu0 0.0
    %993 = vmatpush1.msra.mxu0 0.0
    %994 = vmatprep.subr.mxu0 0.0
    %995 = vmatpush1.msra.mxu0 0.0
    %996 = vmatprep.subr.mxu0 0.0
    %997 = vmatpush1.msra.mxu0 0.0
    %998 = vmatprep.subr.mxu0 0.0
    %999 = vmatpush1.msra.mxu0 0.0
    %1000 = vmatprep.subr.mxu0 0.0
    %1001 = vmatpush1.msra.mxu0 0.0
    %1002 = vmatprep.subr.mxu0 0.0
    %1003 = vmatpush1.msra.mxu0 0.0
    %1004 = vmatprep.subr.mxu0 0.0
    %1005 = vmatpush1.msra.mxu0 0.0
    %1006 = vmatprep.subr.mxu0 0.0
    %1007 = vmatpush1.msra.mxu0 0.0
    %1008 = vmatprep.subr.mxu0 0.0
    %1009 = vmatpush1.msra.mxu0 0.0
    %1010 = vmatprep.subr.mxu0 0.0
    %1011 = vmatpush1.msra.mxu0 0.0
    %1012 = vmatprep.subr.mxu0 0.0
    %1013 = vmatpush1.msra.mxu0 0.0
    %1014 = vmatprep.subr.mxu0 0.0
    %1015 = vmatpush1.msra.mxu0 0.0
    %1016 = vmatprep.subr.mxu0 0.0
    %1017 = vmatpush1.msra.mxu0 0.0
    %1018 = vmatprep.subr.mxu0 0.0
    %1019 = vmatpush1.msra.mxu0 0.0
    %1020 = vmatprep.subr.mxu0 0.0
    %1021 = vmatpush1.msra.mxu0 0.0
    %1022 = vmatprep.mubr.f32.mxu0 0.0
    %1023 = vmatmul.mubr.f32.gmra.mrb[0].mxu0 %v953
    %v1024 = vpop.f32.mrb[0].mxu0
    %v1025 = vadd.f32 %v950, %v1024
    %v1026 = vpop.f32.mrb[0].mxu0
    %1027 = vmatprep.mubr.f32.mxu0 0.0
    %1028 = vmatmul.mubr.f32.gmra.mrb[0].mxu0 %v956
    %v1029 = vpop.f32.mrb[0].mxu0
    %v1030 = vadd.f32 %v950, %v1029
    %v1031 = vpop.f32.mrb[0].mxu0
    %1032 = vdwg.mxu0
    %v1033 = vmul.f32 %v1025, 0.5
    %v1034 = vmul.f32 %v1030, 0.5
    %v1035 = vmul.f32 %v1025, 0.70710677
    %v1036 = vmul.f32 %v1030, 0.70710677
    %v1037 = verf.f32.pop %v1035
    %v1038 = verf.f32.pop %v1036
    %v1039 = vadd.f32 %v1037, 1.0
    %v1040 = vadd.f32 %v1038, 1.0
    %v1041 = vmul.f32 %v1033, %v1039
    %v1042 = vmul.f32 %v1034, %v1040
    %v1043 = vld [vmem:[%s9] sm:$0xff]
    %v1044 = vld [vmem:[%s9 + $0x8] sm:$0xff]
    %v1045 = vld [vmem:[%s9 + $0x10] sm:$0xff]
    %v1046 = vld [vmem:[%s9 + $0x18] sm:$0xff]
    %v1047 = vld [vmem:[%s9 + $0x20] sm:$0xff]
    %v1048 = vld [vmem:[%s9 + $0x28] sm:$0xff]
    %v1049 = vld [vmem:[%s9 + $0x30] sm:$0xff]
    %v1050 = vld [vmem:[%s9 + $0x38] sm:$0xff]
    %v1051 = vld [vmem:[%s10] sm:$0x1]
    %v1053 = vlaneseq
    %v1054 = vshrl.u32 %v1053, 7
    %v1055 = vsub.s32 0, %v1054
    %v1056 = vrot.slane %v1051, %v1055
    %vm1058 = vcmask 523264
    %v1060 = vsel %vm1058, %v1041, 0
    %v1063 = vsel %vm1058, %v1042, 0
    %1065 = vmatprep.subr.mxu0 0.0
    %1066 = vmatpush1.msra.mxu0 %v1043
    %1067 = vmatprep.subr.mxu0 0.0
    %1068 = vmatpush1.msra.mxu0 %v1044
    %1069 = vmatprep.subr.mxu0 0.0
    %1070 = vmatpush1.msra.mxu0 %v1045
    %1071 = vmatprep.subr.mxu0 0.0
    %1072 = vmatpush1.msra.mxu0 %v1046
    %1073 = vmatprep.subr.mxu0 0.0
    %1074 = vmatpush1.msra.mxu0 %v1047
    %1075 = vmatprep.subr.mxu0 0.0
    %1076 = vmatpush1.msra.mxu0 %v1048
    %1077 = vmatprep.subr.mxu0 0.0
    %1078 = vmatpush1.msra.mxu0 %v1049
    %1079 = vmatprep.subr.mxu0 0.0
    %1080 = vmatpush1.msra.mxu0 %v1050
    %1081 = vmatprep.subr.mxu0 0.0
    %1082 = vmatpush1.msra.mxu0 0.0
    %1083 = vmatprep.subr.mxu0 0.0
    %1084 = vmatpush1.msra.mxu0 0.0
    %1085 = vmatprep.subr.mxu0 0.0
    %1086 = vmatpush1.msra.mxu0 0.0
    %1087 = vmatprep.subr.mxu0 0.0
    %1088 = vmatpush1.msra.mxu0 0.0
    %1089 = vmatprep.subr.mxu0 0.0
    %1090 = vmatpush1.msra.mxu0 0.0
    %1091 = vmatprep.subr.mxu0 0.0
    %1092 = vmatpush1.msra.mxu0 0.0
    %1093 = vmatprep.subr.mxu0 0.0
    %1094 = vmatpush1.msra.mxu0 0.0
    %1095 = vmatprep.subr.mxu0 0.0
    %1096 = vmatpush1.msra.mxu0 0.0
    %1097 = vmatprep.subr.mxu0 0.0
    %1098 = vmatpush1.msra.mxu0 0.0
    %1099 = vmatprep.subr.mxu0 0.0
    %1100 = vmatpush1.msra.mxu0 0.0
    %1101 = vmatprep.subr.mxu0 0.0
    %1102 = vmatpush1.msra.mxu0 0.0
    %1103 = vmatprep.subr.mxu0 0.0
    %1104 = vmatpush1.msra.mxu0 0.0
    %1105 = vmatprep.subr.mxu0 0.0
    %1106 = vmatpush1.msra.mxu0 0.0
    %1107 = vmatprep.subr.mxu0 0.0
    %1108 = vmatpush1.msra.mxu0 0.0
    %1109 = vmatprep.subr.mxu0 0.0
    %1110 = vmatpush1.msra.mxu0 0.0
    %1111 = vmatprep.subr.mxu0 0.0
    %1112 = vmatpush1.msra.mxu0 0.0
    %1113 = vmatprep.subr.mxu0 0.0
    %1114 = vmatpush1.msra.mxu0 0.0
    %1115 = vmatprep.subr.mxu0 0.0
    %1116 = vmatpush1.msra.mxu0 0.0
    %1117 = vmatprep.subr.mxu0 0.0
    %1118 = vmatpush1.msra.mxu0 0.0
    %1119 = vmatprep.subr.mxu0 0.0
    %1120 = vmatpush1.msra.mxu0 0.0
    %1121 = vmatprep.subr.mxu0 0.0
    %1122 = vmatpush1.msra.mxu0 0.0
    %1123 = vmatprep.subr.mxu0 0.0
    %1124 = vmatpush1.msra.mxu0 0.0
    %1125 = vmatprep.subr.mxu0 0.0
    %1126 = vmatpush1.msra.mxu0 0.0
    %1127 = vmatprep.subr.mxu0 0.0
    %1128 = vmatpush1.msra.mxu0 0.0
    %1129 = vmatprep.mubr.f32.mxu0 0.0
    %1130 = vmatmul.mubr.f32.gmra.mrb[0].mxu0 %v1060
    %v1131 = vpop.f32.mrb[0].mxu0
    %v1132 = vadd.f32 %v1056, %v1131
    %v1133 = vpop.f32.mrb[0].mxu0
    %1134 = vmatprep.mubr.f32.mxu0 0.0
    %1135 = vmatmul.mubr.f32.gmra.mrb[0].mxu0 %v1063
    %v1136 = vpop.f32.mrb[0].mxu0
    %v1137 = vadd.f32 %v1056, %v1136
    %v1138 = vpop.f32.mrb[0].mxu0
    %1139 = vdwg.mxu0
    %v1140 = vadd.f32 %v1132, %v939
    %v1141 = vadd.f32 %v1137, %v940
    %v1142 = vld [vmem:[%s11] sm:$0x1]
    %v1143 = vld [vmem:[%s12] sm:$0x1]
    %v1144 = vsel %vm140, %v1140, 0.0
    %1145 = vadd.xlane.f32.xlu0 %v1144
    %v1146 = vpop.xlane.xlu0 %1145
    %v1147 = vsel %vm140, %v1141, 0.0
    %1148 = vadd.xlane.f32.xlu0 %v1147
    %v1149 = vpop.xlane.xlu0 %1148
    %v1150 = vmul.f32 %v1146, %v904
    %v1151 = vmul.f32 %v1149, %v904
    %v1152 = vsub.f32 %v1140, %v1150
    %v1153 = vsub.f32 %v1141, %v1151
    %v1154 = vmul.f32 %v1152, %v1152
    %v1155 = vmul.f32 %v1153, %v1153
    %v1156 = vsel %vm140, %v1154, 0.0
    %1157 = vadd.xlane.f32.xlu0 %v1156
    %v1158 = vpop.xlane.xlu0 %1157
    %v1159 = vsel %vm140, %v1155, 0.0
    %1160 = vadd.xlane.f32.xlu0 %v1159
    %v1161 = vpop.xlane.xlu0 %1160
    %v1162 = vmul.f32 %v1158, %v904
    %v1163 = vmul.f32 %v1161, %v904
    %v1164 = vadd.f32 %v1162, 1e-05
    %v1165 = vadd.f32 %v1163, 1e-05
    %v1166 = vrsqrt.pop %v1164
    %v1167 = vrsqrt.pop %v1165
    %v1168 = vmul.f32 %v1152, %v1166
    %v1169 = vmul.f32 %v1153, %v1167
    %v1171 = vlaneseq
    %v1172 = vshrl.u32 %v1171, 7
    %v1173 = vsub.s32 0, %v1172
    %v1174 = vrot.slane %v1142, %v1173
    %v1176 = vmul.f32 %v1168, %v1174
    %v1177 = vmul.f32 %v1169, %v1174
    %v1179 = vlaneseq
    %v1180 = vshrl.u32 %v1179, 7
    %v1181 = vsub.s32 0, %v1180
    %v1182 = vrot.slane %v1143, %v1181
    %v1184 = vadd.f32 %v1176, %v1182
    %v1185 = vadd.f32 %v1177, %v1182
    %1186 = vst.msk [vmem:[#allocation13] sm:$0xff] %vm140, %v1184
    %1187 = vst.msk [vmem:[#allocation13 + $0x8] sm:$0xff] %vm140, %v1185
    // Predicated region
    $region86: #{tpu_custom_call.1} parent=1 // pred_check
      _
    $region87: #{tpu_custom_call.1} parent=1 // pred_check_branch
      %1189 = sbr.rel (0) target = $region89
    $region88: #{tpu_custom_call.1} parent=1 // pred_region
      %s1191 = ssub.s32 256, 256
      %1192 = vsyncadd [#allocation4], %s1191
      %s1193 = sshll.u32 [#allocation13], 4
      %s1194 = int_to_ptr.vmem [resolvable:$true] %s1193
      %1199 = dma.vmem_to_hbm [thread:$0]  %s1194, 256, %s15, [#allocation4], 128, 128, 8
    $region89: #{tpu_custom_call.1} parent=1 // pred_fallthru
      _
    // Predicated region
    $region90: #{tpu_custom_call.1} parent=1 // pred_check
      _
    $region91: #{tpu_custom_call.1} parent=1 // pred_check_branch
      %1201 = sbr.rel (0) target = $region93
    $region92: #{tpu_custom_call.1} parent=1 // pred_region
      %1202 = dma.done [#allocation4], 256
    $region93: #{tpu_custom_call.1} parent=1 // pred_fallthru
      _
    %1203 = vsyncpa [#allocation3], 1
    %1204 = vsyncpa [#allocation6], 1
    %1205 = vsyncpa [#allocation9], 1
    %1206 = vsyncpa [#allocation12], 1
    %1207 = vsyncpa [#allocation4], 1

</llo_original>
